<compile_context>
chip_gen: v5e
topology: v5e:2x2
jax: 0.10.0
libtpu: 0.0.40
codegen_flags: <defaults>
</compile_context>

<pallas_src>
import numpy as np
import jax
import jax.numpy as jnp
from jax.experimental import pallas as pl
from jax.experimental.pallas import tpu as pltpu

CEM_FILTER = 245
C_OUT_PAD = 256   # 245 padded up to a multiple of 128 for lane-dense output stores


def _bilinear_up2_matrix(n_in: int) -> np.ndarray:
    """1-D 2x bilinear upsample matrix (align_corners=False), shape (2*n_in, n_in)."""
    n_out = 2 * n_in
    rows = np.zeros((n_out, n_in), dtype=np.float32)
    for i in range(n_out):
        coord = (i + 0.5) * 0.5 - 0.5
        coord = max(coord, 0.0)                      # PyTorch clamps negative src coords
        i0 = int(coord)
        i1 = min(i0 + 1, n_in - 1)
        frac = coord - i0
        rows[i, i0] += 1.0 - frac
        rows[i, i1] += frac
    # The bias fold (U @ bcast(b5) == bcast(b5)) relies on every row summing to exactly 1.
    assert np.allclose(rows.sum(axis=1), 1.0), "bilinear rows must sum to 1"
    return rows


def _pick_tile_s(hw: int) -> int:
    """Spatial tile (rows per step): multiple of 8, prefer >= 2 steps for pipeline depth."""
    for t in (512, 384, 256, 128, 64, 32, 16, 8):
        if hw % t == 0 and hw // t >= 2:
            return t
    return hw   # tiny maps: single full-extent block (still satisfies the (8,128) rule)


def cem_kernel(c4_ref, c5_ref, u_ref, w45_ref, bias_ref, o_ref):
    n = pl.program_id(0)                     # batch index

    c4 = c4_ref[0]                           # (TILE_S, Cin) bf16; cols [C4in:Cin) are zero
    c5 = c5_ref[0]                           # (h*w,   Cin) bf16; cols [0:C4in)   are zero

    # 2x bilinear upsample of the raw C5 feature for this spatial tile (before the 1x1
    # conv -> far fewer MACs than upsampling the 245-channel conv output).
    c5_up = jnp.dot(u_ref[...], c5, preferred_element_type=jnp.float32)   # (TILE_S, Cin) f32

    # Disjoint-column "concat": c4 lives in cols [0:C4in), c5_up in cols [C4in:Cin), so a
    # plain add assembles the fused-matmul input without any in-kernel lane concatenate.
    x = (c4.astype(jnp.float32) + c5_up).astype(jnp.bfloat16)             # (TILE_S, Cin) bf16

    # Single fused K=Cin 1x1-conv matmul over both branches (output pre-padded to 256).
    acc = jnp.dot(x, w45_ref[...], preferred_element_type=jnp.float32)    # (TILE_S, 256) f32

    # bias_ref holds the whole (N, 256) table resident; row n folds b4 + b5 + (cglb@w6 + b6).
    bias = bias_ref[pl.ds(n, 1), :]                                       # (1, 256) f32

    o_ref[0] = (acc + bias).astype(o_ref.dtype)                           # bf16 store, lane-dense


def cem_forward(c4_nhwc, c5_nhwc, cglb, params, *, trim=False):
    """c4_nhwc: (N,H,W,C4in); c5_nhwc: (N,h,w,C5in); cglb: (N,Cgin,1,1) or (N,Cgin).

    Returns (N, H, W, C_OUT_PAD) bf16 with channels [CEM_FILTER:) exactly zero
    (lane-padded so the consumer can fuse the trim); pass trim=True for exactly
    the 245-channel module output.
    """
    N, H, W, C4in = c4_nhwc.shape
    _, h, w, C5in = c5_nhwc.shape
    assert H == 2 * h and W == 2 * w
    w4, b4, w5, b5, w6, b6 = params
    Cin = C4in + C5in

    # Fold global path + both conv biases into one per-batch bias row (f32, tiny).
    cglb2d = cglb.reshape(N, -1).astype(jnp.float32)
    bias_total = cglb2d @ w6.astype(jnp.float32) + b6 + b4 + b5              # (N, 245)
    bias_pad = jnp.pad(bias_total, ((0, 0), (0, C_OUT_PAD - CEM_FILTER)))    # (N, 256)

    # bf16 operands (f32 accumulation in the kernel).  Disjoint-column layout:
    # c4 in cols [0:C4in), c5 in cols [C4in:Cin) -> enables the fused K=Cin matmul.
    c4_flat = jnp.pad(c4_nhwc.reshape(N, H * W, C4in),
                      ((0, 0), (0, 0), (0, C5in))).astype(jnp.bfloat16)      # (N, H*W, Cin)
    c5_flat = jnp.pad(c5_nhwc.reshape(N, h * w, C5in),
                      ((0, 0), (0, 0), (C4in, 0))).astype(jnp.bfloat16)      # (N, h*w, Cin)

    # Fused conv weight: rows [0:C4in) = w4, rows [C4in:Cin) = w5; lane-padded to 256.
    w45 = jnp.concatenate([w4, w5], axis=0)                                  # (Cin, 245)
    w45_pad = jnp.pad(w45, ((0, 0), (0, C_OUT_PAD - CEM_FILTER))).astype(jnp.bfloat16)

    # Host-built compile-time constant; entries are exactly bf16-representable.
    u = jnp.asarray(np.kron(_bilinear_up2_matrix(h), _bilinear_up2_matrix(w)),
                    dtype=jnp.bfloat16)                                      # (H*W, h*w)

    tile_s = _pick_tile_s(H * W)
    grid = (N, (H * W) // tile_s)

    out_flat = pl.pallas_call(
        cem_kernel,
        out_shape=jax.ShapeDtypeStruct((N, H * W, C_OUT_PAD), jnp.bfloat16),
        grid_spec=pltpu.PrefetchScalarGridSpec(
            num_scalar_prefetch=0,
            grid=grid,
            in_specs=[
                # Per-step tiles: c4 rows and the matching U rows.
                pl.BlockSpec((1, tile_s, Cin), lambda n, s: (n, s, 0)),
                # c5 block constant across s (re-DMA only at batch boundary).
                pl.BlockSpec((1, h * w, Cin), lambda n, s: (n, 0, 0)),
                pl.BlockSpec((tile_s, h * w), lambda n, s: (s, 0)),
                # Constant index_map -> fused weight / bias table fetched once, stay resident.
                pl.BlockSpec((Cin, C_OUT_PAD), lambda n, s: (0, 0)),
                pl.BlockSpec((N, C_OUT_PAD), lambda n, s: (0, 0)),
            ],
            out_specs=pl.BlockSpec((1, tile_s, C_OUT_PAD), lambda n, s: (n, s, 0)),
        ),
        compiler_params=pltpu.CompilerParams(
            dimension_semantics=("parallel", "parallel")),
    )(c4_flat, c5_flat, u, w45_pad, bias_pad)

    out = out_flat.reshape(N, H, W, C_OUT_PAD)
    if trim:
        out = out[..., :CEM_FILTER]
    return out


if __name__ == "__main__":
    # Small shapes consistent with the module: C4 at (N, 16, 16, C4in),
    # C5 at half resolution, Cglb is a globally pooled (N, Cgin, 1, 1) feature.
    N, H, W = 2, 16, 16
    h, w = H // 2, W // 2
    C4in, C5in, Cgin = 16, 32, 32

    key = jax.random.PRNGKey(0)
    k = jax.random.split(key, 9)
    c4 = jax.random.normal(k[0], (N, H, W, C4in), dtype=jnp.float32)
    c5 = jax.random.normal(k[1], (N, h, w, C5in), dtype=jnp.float32)
    cglb = jax.random.normal(k[2], (N, Cgin, 1, 1), dtype=jnp.float32)

    # Deterministic synthetic parameters (1x1 conv kernels stored as (Cin, Cout)).
    w4 = 0.05 * jax.random.normal(k[3], (C4in, CEM_FILTER), dtype=jnp.float32)
    b4 = 0.01 * jax.random.normal(k[4], (CEM_FILTER,), dtype=jnp.float32)
    w5 = 0.05 * jax.random.normal(k[5], (C5in, CEM_FILTER), dtype=jnp.float32)
    b5 = 0.01 * jax.random.normal(k[6], (CEM_FILTER,), dtype=jnp.float32)
    w6 = 0.05 * jax.random.normal(k[7], (Cgin, CEM_FILTER), dtype=jnp.float32)
    b6 = 0.01 * jax.random.normal(k[8], (CEM_FILTER,), dtype=jnp.float32)
    params = (w4, b4, w5, b5, w6, b6)

    out = jax.block_until_ready(cem_forward(c4, c5, cglb, params))

    # Pure-JAX reference mirroring the kernel's bf16 operand rounding (f32 accumulation).
    def bf16_round(x):
        return x.astype(jnp.bfloat16).astype(jnp.float32)

    u_f = jnp.asarray(np.kron(_bilinear_up2_matrix(h), _bilinear_up2_matrix(w)),
                      dtype=jnp.float32)
    c4_b = bf16_round(c4).reshape(N, H * W, C4in)
    c5_b = bf16_round(c5).reshape(N, h * w, C5in)
    c5_up = bf16_round(jnp.einsum('pq,nqc->npc', u_f, c5_b))
    g_lat = cglb.reshape(N, Cgin) @ w6 + b6
    ref = (c4_b @ bf16_round(w4) + c5_up @ bf16_round(w5)
           + (g_lat + b4 + b5)[:, None, :]).reshape(N, H, W, CEM_FILTER)

    assert out.shape == (N, H, W, C_OUT_PAD)
    assert out.dtype == jnp.bfloat16
    # Lane-padding channels must be exactly zero.
    assert bool(jnp.all(out[..., CEM_FILTER:] == 0))
    out_245 = out[..., :CEM_FILTER].astype(jnp.float32)
    # Tolerance covers the intentional bf16 output rounding (~2^-8 relative).
    assert jnp.allclose(out_245, ref, atol=2e-2, rtol=2e-2), \
        float(jnp.max(jnp.abs(out_245 - ref)))
    print("KERNEL_OK")
</pallas_src>

<mosaic_0001>
module attributes {stable_mosaic.version = 11 : i64} {
  func.func @cem_kernel(%arg0: i32, %arg1: i32, %arg2: memref<1x128x48xbf16, #tpu.memory_space<vmem>>, %arg3: memref<1x64x48xbf16, #tpu.memory_space<vmem>>, %arg4: memref<128x64xbf16, #tpu.memory_space<vmem>>, %arg5: memref<48x256xbf16, #tpu.memory_space<vmem>>, %arg6: memref<2x256xf32, #tpu.memory_space<vmem>>, %arg7: memref<1x128x256xbf16, #tpu.memory_space<vmem>>) attributes {dimension_semantics = [#tpu.dimension_semantics<parallel>, #tpu.dimension_semantics<parallel>], iteration_bounds = array<i64: 2, 2>, scalar_prefetch = 0 : i64, scratch_operands = 0 : i64, tpu.core_type = #tpu.core_type<tc>, window_params = [{transform_indices = @transform_0, window_bounds = array<i64: 1, 128, 48>}, {transform_indices = @transform_1, window_bounds = array<i64: 1, 64, 48>}, {transform_indices = @transform_2, window_bounds = array<i64: 128, 64>}, {pipeline_mode = #tpu.pipeline_mode<synchronous>, transform_indices = @transform_3, window_bounds = array<i64: 48, 256>}, {pipeline_mode = #tpu.pipeline_mode<synchronous>, transform_indices = @transform_4, window_bounds = array<i64: 2, 256>}, {transform_indices = @transform_5, window_bounds = array<i64: 1, 128, 256>}]} {
    %c0 = arith.constant 0 : index
    %c0_0 = arith.constant 0 : index
    %c0_1 = arith.constant 0 : index
    %0 = vector.load %arg2[%c0, %c0_0, %c0_1] : memref<1x128x48xbf16, #tpu.memory_space<vmem>>, vector<1x128x48xbf16>
    %1 = vector.shape_cast %0 : vector<1x128x48xbf16> to vector<128x48xbf16>
    %c0_2 = arith.constant 0 : index
    %c0_3 = arith.constant 0 : index
    %c0_4 = arith.constant 0 : index
    %2 = vector.load %arg3[%c0_2, %c0_3, %c0_4] : memref<1x64x48xbf16, #tpu.memory_space<vmem>>, vector<1x64x48xbf16>
    %3 = vector.shape_cast %2 : vector<1x64x48xbf16> to vector<64x48xbf16>
    %c0_5 = arith.constant 0 : index
    %c0_6 = arith.constant 0 : index
    %4 = vector.load %arg4[%c0_5, %c0_6] : memref<128x64xbf16, #tpu.memory_space<vmem>>, vector<128x64xbf16>
    %cst = arith.constant dense<0.000000e+00> : vector<128x48xf32>
    %5 = tpu.matmul %4, %3, %cst {dimension_numbers = #tpu.dot_dimension_numbers<[1], [0], [0], [1], [0, 0, 1, 1], [], []>} : vector<128x64xbf16>, vector<64x48xbf16>, vector<128x48xf32> -> vector<128x48xf32>
    %6 = arith.extf %1 : vector<128x48xbf16> to vector<128x48xf32>
    %7 = arith.addf %6, %5 : vector<128x48xf32>
    %8 = arith.truncf %7 : vector<128x48xf32> to vector<128x48xbf16>
    %c0_7 = arith.constant 0 : index
    %c0_8 = arith.constant 0 : index
    %9 = vector.load %arg5[%c0_7, %c0_8] : memref<48x256xbf16, #tpu.memory_space<vmem>>, vector<48x256xbf16>
    %cst_9 = arith.constant dense<0.000000e+00> : vector<128x256xf32>
    %10 = tpu.matmul %8, %9, %cst_9 {dimension_numbers = #tpu.dot_dimension_numbers<[1], [0], [0], [1], [0, 0, 1, 1], [], []>} : vector<128x48xbf16>, vector<48x256xbf16>, vector<128x256xf32> -> vector<128x256xf32>
    %11 = arith.index_cast %arg0 : i32 to index
    %c0_10 = arith.constant 0 : index
    %12 = vector.load %arg6[%11, %c0_10] : memref<2x256xf32, #tpu.memory_space<vmem>>, vector<1x256xf32>
    %13 = vector.broadcast %12 : vector<1x256xf32> to vector<128x256xf32>
    %14 = arith.addf %10, %13 : vector<128x256xf32>
    %15 = arith.truncf %14 : vector<128x256xf32> to vector<128x256xbf16>
    %c0_11 = arith.constant 0 : index
    %c0_12 = arith.constant 0 : index
    %c0_13 = arith.constant 0 : index
    %16 = vector.load %arg7[%c0_11, %c0_12, %c0_13] : memref<1x128x256xbf16, #tpu.memory_space<vmem>>, vector<1x128x256xbf16>
    %17 = vector.shape_cast %16 : vector<1x128x256xbf16> to vector<128x256xbf16>
    %18 = vector.shape_cast %15 : vector<128x256xbf16> to vector<1x128x256xbf16>
    tpu.vector_store %arg7[%c0_11, %c0_12, %c0_13], %18 {strides = array<i32>} : memref<1x128x256xbf16, #tpu.memory_space<vmem>>, vector<1x128x256xbf16>,
    return
  }
  func.func @transform_0(%arg0: i32, %arg1: i32) -> (i32, i32, i32) {
    %c0_i32 = arith.constant 0 : i32
    %c0_i32_0 = arith.constant 0 : i32
    return %arg0, %arg1, %c0_i32 : i32, i32, i32
  }
  func.func @transform_1(%arg0: i32, %arg1: i32) -> (i32, i32, i32) {
    %c0_i32 = arith.constant 0 : i32
    %c0_i32_0 = arith.constant 0 : i32
    %c0_i32_1 = arith.constant 0 : i32
    return %arg0, %c0_i32, %c0_i32_0 : i32, i32, i32
  }
  func.func @transform_2(%arg0: i32, %arg1: i32) -> (i32, i32) {
    %c0_i32 = arith.constant 0 : i32
    %c0_i32_0 = arith.constant 0 : i32
    return %arg1, %c0_i32 : i32, i32
  }
  func.func @transform_3(%arg0: i32, %arg1: i32) -> (i32, i32) {
    %c0_i32 = arith.constant 0 : i32
    %c0_i32_0 = arith.constant 0 : i32
    %c0_i32_1 = arith.constant 0 : i32
    return %c0_i32, %c0_i32_0 : i32, i32
  }
  func.func @transform_4(%arg0: i32, %arg1: i32) -> (i32, i32) {
    %c0_i32 = arith.constant 0 : i32
    %c0_i32_0 = arith.constant 0 : i32
    %c0_i32_1 = arith.constant 0 : i32
    return %c0_i32, %c0_i32_0 : i32, i32
  }
  func.func @transform_5(%arg0: i32, %arg1: i32) -> (i32, i32, i32) {
    %c0_i32 = arith.constant 0 : i32
    %c0_i32_0 = arith.constant 0 : i32
    return %arg0, %arg1, %c0_i32 : i32, i32, i32
  }
}

</mosaic_0001>

<llo_original>
// kernel: tpu_custom_call.1
$region0: #{tpu_custom_call.1}
  #allocation0 [shape = 'u32[]', space=smem, size = 0x4, offset = 0x4, fixed_abs, tag = 'smem constant byte address 0x4 - core index']
  #allocation1 [shape = 'u32[72,128]{1,0:T(1,128)}', space=vmem, size = 0x9000, scoped, tag = 'internal scratch']
  %s0 = inlined_call_operand.vmem [shape: bf16[2,256,48], index: 0, kind: input, shape index: {}]
  %s1 = inlined_call_operand.vmem [shape: bf16[2,64,48], index: 1, kind: input, shape index: {}]
  %s2 = inlined_call_operand.vmem [shape: bf16[256,64], index: 2, kind: input, shape index: {}]
  %s3 = inlined_call_operand.vmem [shape: bf16[48,256], index: 3, kind: input, shape index: {}]
  %s4 = inlined_call_operand.vmem [shape: f32[2,256], index: 4, kind: input, shape index: {}]
  %s5 = inlined_call_operand.hbm [shape: bf16[2,256,256], index: 5, kind: output, shape index: {}]
  %s6 = sld [smem:[#allocation0]]
  $region53: #{tpu_custom_call.1} parent=0
    _
  %s8 = ssub.s32 1, %s6
  %s9 = scalar_select 0, %s8, %s6
  $region1: #{tpu_custom_call.1} parent=0
    #allocation2 [shape = 'u8[131072]{0}', space=vmem, size = 0x20000, scoped, tag = 'output window, operand 0']
    #allocation3 [shape = 's32[2]{0}', space=sflag, size = 0x8, scoped, tag = 'scoped memory for tpu_custom_call.1']
    %10 = vsyncpa [#allocation3], 0
    %s11 = scalar_lea.sflag [#allocation3], 1
    %12 = vsyncpa %s11, 0
    loop: start=0, step=1, limit=6
    $region2: #{tpu_custom_call.1} parent=1 // loop_pre_header
      _
    $region3: #{tpu_custom_call.1} parent=1 // loop_header
      %s14 = sphi 0, %s18
      %p15 = scmp.ge.s32.totalorder %s14, 6
      %s21 = sphi 0, %s33
      %s22 = sphi 0, %s29
      %s23 = sphi 0, %s21
      %s24 = sphi 0, %s22
      %s25 = sphi 0, %s23
      %s26 = sphi 0, %s24
      %s38 = sphi 0, %s40
      %s41 = sphi 0, %s38
      %s42 = sphi 0, %s41
      %s58 = sphi 0, %s42
      %s64 = sphi 0, %s66
      %s67 = sphi 0, %s64
      %s68 = sphi 0, %s67
      %s84 = sphi 0, %s68
      %s90 = sphi 0, %s92
      %s93 = sphi 0, %s90
      %s94 = sphi 0, %s93
      %s110 = sphi 0, %s94
      %s114 = sphi 0, %s114
      %s116 = sphi 0, %s114
      %s117 = sphi 0, %s116
      %s131 = sphi 0, %s117
      %s135 = sphi 0, %s135
      %s137 = sphi 0, %s135
      %s138 = sphi 0, %s137
      %s152 = sphi 0, %s138
      %s160 = sphi 0, %s162
      %s163 = sphi 0, %s160
      %s164 = sphi 0, %s163
      %s180 = sphi 0, %s164
    $region4: #{tpu_custom_call.1} parent=1 // loop_header_branch
      %17 = sbr.rel (%p15) target = $region8
    $region5: #{tpu_custom_call.1} parent=1 // loop_body
      %s19 = ssub.s32 %s14, 1
      %s20 = ssub.s32 %s14, 2
      %s27 = sadd.s32 1, %s22
      %p28 = scmp.ge.s32.totalorder %s27, 2
      %s29 = scalar_select %p28, 0, %s27
      %s30 = sadd.s32 1, %s21
      %s31 = scalar_select %p28, %s30, %s21
      %p32 = scmp.ge.s32.totalorder %s31, 2
      %s33 = scalar_select %p32, 0, %s31
      %s34 = ssub.s32 %s21, %s33
      %s35 = ssub.s32 %s22, %s29
      %s36 = sor.u32 %s34, %s35
      %p37 = scmp.eq.s32.totalorder %s36, 0
      %s39 = sadd.s32 %s38, 1
      %s40 = scalar_select %p37, %s38, %s39
      %p43 = pneg %p37
      %p44 = scmp.eq.s32.totalorder %s14, 3
      %p45 = por %p43, %p44
      %p46 = scmp.ne.s32.totalorder %s38, %s41
      %p47 = scmp.eq.s32.totalorder %s14, 0
      %p48 = por %p46, %p47
      %p49 = scmp.ne.s32.totalorder %s38, %s41
      %p50 = scmp.eq.s32.totalorder %s19, 3
      %p51 = por %p49, %p50
      %p52 = scmp.ne.s32.totalorder %s41, %s42
      %p53 = scmp.eq.s32.totalorder %s19, 0
      %p54 = por %p52, %p53
      %p55 = scmp.ne.s32.totalorder %s41, %s42
      %p56 = scmp.eq.s32.totalorder %s20, 3
      %p57 = por %p55, %p56
      %p59 = scmp.ne.s32.totalorder %s42, %s58
      %p60 = scmp.eq.s32.totalorder %s20, 0
      %p61 = por %p59, %p60
      %s62 = ssub.s32 %s21, %s33
      %p63 = scmp.eq.s32.totalorder %s62, 0
      %s65 = sadd.s32 %s64, 1
      %s66 = scalar_select %p63, %s64, %s65
      %p69 = pneg %p63
      %p70 = scmp.eq.s32.totalorder %s14, 3
      %p71 = por %p69, %p70
      %p72 = scmp.ne.s32.totalorder %s64, %s67
      %p73 = scmp.eq.s32.totalorder %s14, 0
      %p74 = por %p72, %p73
      %p75 = scmp.ne.s32.totalorder %s64, %s67
      %p76 = scmp.eq.s32.totalorder %s19, 3
      %p77 = por %p75, %p76
      %p78 = scmp.ne.s32.totalorder %s67, %s68
      %p79 = scmp.eq.s32.totalorder %s19, 0
      %p80 = por %p78, %p79
      %p81 = scmp.ne.s32.totalorder %s67, %s68
      %p82 = scmp.eq.s32.totalorder %s20, 3
      %p83 = por %p81, %p82
      %p85 = scmp.ne.s32.totalorder %s68, %s84
      %p86 = scmp.eq.s32.totalorder %s20, 0
      %p87 = por %p85, %p86
      %s88 = ssub.s32 %s22, %s29
      %p89 = scmp.eq.s32.totalorder %s88, 0
      %s91 = sadd.s32 %s90, 1
      %s92 = scalar_select %p89, %s90, %s91
      %p95 = pneg %p89
      %p96 = scmp.eq.s32.totalorder %s14, 3
      %p97 = por %p95, %p96
      %p98 = scmp.ne.s32.totalorder %s90, %s93
      %p99 = scmp.eq.s32.totalorder %s14, 0
      %p100 = por %p98, %p99
      %p101 = scmp.ne.s32.totalorder %s90, %s93
      %p102 = scmp.eq.s32.totalorder %s19, 3
      %p103 = por %p101, %p102
      %p104 = scmp.ne.s32.totalorder %s93, %s94
      %p105 = scmp.eq.s32.totalorder %s19, 0
      %p106 = por %p104, %p105
      %p107 = scmp.ne.s32.totalorder %s93, %s94
      %p108 = scmp.eq.s32.totalorder %s20, 3
      %p109 = por %p107, %p108
      %p111 = scmp.ne.s32.totalorder %s94, %s110
      %p112 = scmp.eq.s32.totalorder %s20, 0
      %p113 = por %p111, %p112
      %s115 = sadd.s32 %s114, 1
      %p118 = scmp.eq.s32.totalorder %s14, 3
      %p119 = scmp.ne.s32.totalorder %s114, %s116
      %p120 = scmp.eq.s32.totalorder %s14, 0
      %p121 = por %p119, %p120
      %p122 = scmp.ne.s32.totalorder %s114, %s116
      %p123 = scmp.eq.s32.totalorder %s19, 3
      %p124 = por %p122, %p123
      %p125 = scmp.ne.s32.totalorder %s116, %s117
      %p126 = scmp.eq.s32.totalorder %s19, 0
      %p127 = por %p125, %p126
      %p128 = scmp.ne.s32.totalorder %s116, %s117
      %p129 = scmp.eq.s32.totalorder %s20, 3
      %p130 = por %p128, %p129
      %p132 = scmp.ne.s32.totalorder %s117, %s131
      %p133 = scmp.eq.s32.totalorder %s20, 0
      %p134 = por %p132, %p133
      %s136 = sadd.s32 %s135, 1
      %p139 = scmp.eq.s32.totalorder %s14, 3
      %p140 = scmp.ne.s32.totalorder %s135, %s137
      %p141 = scmp.eq.s32.totalorder %s14, 0
      %p142 = por %p140, %p141
      %p143 = scmp.ne.s32.totalorder %s135, %s137
      %p144 = scmp.eq.s32.totalorder %s19, 3
      %p145 = por %p143, %p144
      %p146 = scmp.ne.s32.totalorder %s137, %s138
      %p147 = scmp.eq.s32.totalorder %s19, 0
      %p148 = por %p146, %p147
      %p149 = scmp.ne.s32.totalorder %s137, %s138
      %p150 = scmp.eq.s32.totalorder %s20, 3
      %p151 = por %p149, %p150
      %p153 = scmp.ne.s32.totalorder %s138, %s152
      %p154 = scmp.eq.s32.totalorder %s20, 0
      %p155 = por %p153, %p154
      %s156 = ssub.s32 %s21, %s33
      %s157 = ssub.s32 %s22, %s29
      %s158 = sor.u32 %s156, %s157
      %p159 = scmp.eq.s32.totalorder %s158, 0
      %s161 = sadd.s32 %s160, 1
      %s162 = scalar_select %p159, %s160, %s161
      %p165 = pneg %p159
      %p166 = scmp.eq.s32.totalorder %s14, 3
      %p167 = por %p165, %p166
      %p168 = scmp.ne.s32.totalorder %s160, %s163
      %p169 = scmp.eq.s32.totalorder %s14, 0
      %p170 = por %p168, %p169
      %p171 = scmp.ne.s32.totalorder %s160, %s163
      %p172 = scmp.eq.s32.totalorder %s19, 3
      %p173 = por %p171, %p172
      %p174 = scmp.ne.s32.totalorder %s163, %s164
      %p175 = scmp.eq.s32.totalorder %s19, 0
      %p176 = por %p174, %p175
      %p177 = scmp.ne.s32.totalorder %s163, %s164
      %p178 = scmp.eq.s32.totalorder %s20, 3
      %p179 = por %p177, %p178
      %p181 = scmp.ne.s32.totalorder %s164, %s180
      %p182 = scmp.eq.s32.totalorder %s20, 0
      %p183 = por %p181, %p182
      %p184 = scmp.le.s32.totalorder 1, %s14
      %p185 = scmp.lt.s32.totalorder %s14, 5
      %p186 = pnand %p184, %p185
      %p187 = pneg %p186
      // Predicated region
      $region9: #{tpu_custom_call.1} parent=5 // pred_check
        _
      $region10: #{tpu_custom_call.1} parent=5 // pred_check_branch
        %189 = sbr.rel (%p186) target = $region12
      $region11: #{tpu_custom_call.1} parent=5 // pred_region
        %s190 = ssub.s32 %s14, 1
        // Predicated region
        $region13: #{tpu_custom_call.1} parent=11 // pred_check
          %p191 = pneg %p127
        $region14: #{tpu_custom_call.1} parent=11 // pred_check_branch
          %193 = sbr.rel (%p191) target = $region16
        $region15: #{tpu_custom_call.1} parent=11 // pred_region
          _
        $region16: #{tpu_custom_call.1} parent=11 // pred_fallthru
          _
        // Predicated region
        $region17: #{tpu_custom_call.1} parent=11 // pred_check
          %p194 = pneg %p148
        $region18: #{tpu_custom_call.1} parent=11 // pred_check_branch
          %196 = sbr.rel (%p194) target = $region20
        $region19: #{tpu_custom_call.1} parent=11 // pred_region
          _
        $region20: #{tpu_custom_call.1} parent=11 // pred_fallthru
          _
      $region12: #{tpu_custom_call.1} parent=5 // pred_fallthru
        _
      %p197 = scmp.lt.s32.totalorder %s14, 4
      // Predicated region
      $region21: #{tpu_custom_call.1} parent=5 // pred_check
        %p198 = pneg %p197
      $region22: #{tpu_custom_call.1} parent=5 // pred_check_branch
        %200 = sbr.rel (%p198) target = $region24
      $region23: #{tpu_custom_call.1} parent=5 // pred_region
        // Predicated region
        $region25: #{tpu_custom_call.1} parent=23 // pred_check
          %p201 = pneg %p48
        $region26: #{tpu_custom_call.1} parent=23 // pred_check_branch
          %203 = sbr.rel (%p201) target = $region28
        $region27: #{tpu_custom_call.1} parent=23 // pred_region
          %s204 = smul.u32 16, %s22
          %p205 = scmp.lt.s32.totalorder %s21, 1
          %s206 = scalar_select %p205, %s21, 1
          %p207 = scmp.lt.s32.totalorder %s204, 31
          %s208 = scalar_select %p207, %s204, 31
          %s209 = smul.addr %s206, 32
          %s210 = sadd.s32 %s208, %s209
          %s211 = smul.addr %s210, 4
          %s212 = scalar_lea.vmem %s0, %s211
          %s213 = smul.u32 16, %s22
        $region28: #{tpu_custom_call.1} parent=23 // pred_fallthru
          _
        // Predicated region
        $region29: #{tpu_custom_call.1} parent=23 // pred_check
          %p214 = pneg %p74
        $region30: #{tpu_custom_call.1} parent=23 // pred_check_branch
          %216 = sbr.rel (%p214) target = $region32
        $region31: #{tpu_custom_call.1} parent=23 // pred_region
          %p217 = scmp.lt.s32.totalorder %s21, 1
          %s218 = scalar_select %p217, %s21, 1
          %s219 = smul.addr %s218, 8
          %s220 = smul.addr %s219, 4
          %s221 = scalar_lea.vmem %s1, %s220
        $region32: #{tpu_custom_call.1} parent=23 // pred_fallthru
          _
        // Predicated region
        $region33: #{tpu_custom_call.1} parent=23 // pred_check
          %p222 = pneg %p100
        $region34: #{tpu_custom_call.1} parent=23 // pred_check_branch
          %224 = sbr.rel (%p222) target = $region36
        $region35: #{tpu_custom_call.1} parent=23 // pred_region
          %s225 = smul.u32 16, %s22
          %p226 = scmp.lt.s32.totalorder %s225, 31
          %s227 = scalar_select %p226, %s225, 31
          %s228 = smul.addr %s227, 4
          %s229 = scalar_lea.vmem %s2, %s228
          %s230 = smul.u32 16, %s22
        $region36: #{tpu_custom_call.1} parent=23 // pred_fallthru
          _
      $region24: #{tpu_custom_call.1} parent=5 // pred_fallthru
        _
      %p231 = scmp.le.s32.totalorder 1, %s14
      %p232 = scmp.lt.s32.totalorder %s14, 5
      %p233 = pnand %p231, %p232
      %p234 = pneg %p233
      // Predicated region
      $region37: #{tpu_custom_call.1} parent=5 // pred_check
        _
      $region38: #{tpu_custom_call.1} parent=5 // pred_check_branch
        %236 = sbr.rel (%p233) target = $region40
      $region39: #{tpu_custom_call.1} parent=5 // pred_region
        %s237 = ssub.s32 %s14, 1
        %s238 = smul.u32 16, %s24
        %p239 = scmp.lt.s32.totalorder %s23, 1
        %s240 = scalar_select %p239, %s23, 1
        %p241 = scmp.lt.s32.totalorder %s238, 31
        %s242 = scalar_select %p241, %s238, 31
        %s243 = smul.addr %s240, 32
        %s244 = sadd.s32 %s242, %s243
        %s245 = smul.addr %s244, 4
        %s246 = scalar_lea.vmem %s0, %s245
        %p247 = pneg %p54
        %p248 = pneg %p51
        %p249 = scmp.lt.s32.totalorder %s23, 1
        %s250 = scalar_select %p249, %s23, 1
        %s251 = smul.addr %s250, 8
        %s252 = smul.addr %s251, 4
        %s253 = scalar_lea.vmem %s1, %s252
        %p254 = pneg %p80
        %p255 = pneg %p77
        %s256 = smul.u32 16, %s24
        %p257 = scmp.lt.s32.totalorder %s256, 31
        %s258 = scalar_select %p257, %s256, 31
        %s259 = smul.addr %s258, 4
        %s260 = scalar_lea.vmem %s2, %s259
        %p261 = pneg %p106
        %p262 = pneg %p103
        %p263 = pneg %p127
        %p264 = pneg %p124
        %p265 = pneg %p148
        %p266 = pneg %p145
        %p267 = pneg %p176
        %p268 = pneg %p173
        %s269 = sand.u32 %s163, 1
        %s270 = scalar_lea.sflag [#allocation3], %s269
        %s271 = sand.u32 %s163, 1
        %s272 = smul.addr %s271, 128
        %s273 = scalar_lea.vmem [#allocation2], %s272
        %s274 = smul.u32 16, %s24
        %p275 = scmp.lt.s32.totalorder %s23, 1
        %s276 = scalar_select %p275, %s23, 1
        %p277 = scmp.lt.s32.totalorder %s274, 31
        %s278 = scalar_select %p277, %s274, 31
        %s279 = smul.addr %s276, 32
        %s280 = sadd.s32 %s278, %s279
        %s281 = smul.addr %s280, 4
        %s282 = scalar_lea.vmem %s0, %s281
        %s283 = smul.u32 16, %s24
        %p284 = scmp.lt.s32.totalorder %s23, 1
        %s285 = scalar_select %p284, %s23, 1
        %s286 = smul.addr %s285, 8
        %s287 = smul.addr %s286, 4
        %s288 = scalar_lea.vmem %s1, %s287
        %s289 = smul.u32 16, %s24
        %p290 = scmp.lt.s32.totalorder %s289, 31
        %s291 = scalar_select %p290, %s289, 31
        %s292 = smul.addr %s291, 4
        %s293 = scalar_lea.vmem %s2, %s292
        %s294 = smul.u32 16, %s24
        %s295 = smul.u32 16, %s24
        %v297 = vld [vmem:[%s282] sm:$0xf]
        %v298 = vld [vmem:[%s282 + $0x4] sm:$0xf]
        %v299 = vld [vmem:[%s282 + $0x8] sm:$0xf]
        %v300 = vld [vmem:[%s282 + $0xc] sm:$0xf]
        %v301 = vld [vmem:[%s282 + $0x10] sm:$0xf]
        %v302 = vld [vmem:[%s282 + $0x14] sm:$0xf]
        %v303 = vld [vmem:[%s282 + $0x18] sm:$0xf]
        %v304 = vld [vmem:[%s282 + $0x1c] sm:$0xf]
        %v305 = vld [vmem:[%s282 + $0x20] sm:$0xf]
        %v306 = vld [vmem:[%s282 + $0x24] sm:$0xf]
        %v307 = vld [vmem:[%s282 + $0x28] sm:$0xf]
        %v308 = vld [vmem:[%s282 + $0x2c] sm:$0xf]
        %v309 = vld [vmem:[%s282 + $0x30] sm:$0xf]
        %v310 = vld [vmem:[%s282 + $0x34] sm:$0xf]
        %v311 = vld [vmem:[%s282 + $0x38] sm:$0xf]
        %v312 = vld [vmem:[%s282 + $0x3c] sm:$0xf]
        %v313 = vld [vmem:[%s288] sm:$0xf]
        %v314 = vld [vmem:[%s288 + $0x4] sm:$0xf]
        %v315 = vld [vmem:[%s288 + $0x8] sm:$0xf]
        %v316 = vld [vmem:[%s288 + $0xc] sm:$0xf]
        %v317 = vld [vmem:[%s288 + $0x10] sm:$0xf]
        %v318 = vld [vmem:[%s288 + $0x14] sm:$0xf]
        %v319 = vld [vmem:[%s288 + $0x18] sm:$0xf]
        %v320 = vld [vmem:[%s288 + $0x1c] sm:$0xf]
        %v321 = vld [vmem:[%s293] sm:$0xf]
        %v322 = vld [vmem:[%s293 + $0x4] sm:$0xf]
        %v323 = vld [vmem:[%s293 + $0x8] sm:$0xf]
        %v324 = vld [vmem:[%s293 + $0xc] sm:$0xf]
        %v325 = vld [vmem:[%s293 + $0x10] sm:$0xf]
        %v326 = vld [vmem:[%s293 + $0x14] sm:$0xf]
        %v327 = vld [vmem:[%s293 + $0x18] sm:$0xf]
        %v328 = vld [vmem:[%s293 + $0x1c] sm:$0xf]
        %v329 = vld [vmem:[%s293 + $0x20] sm:$0xf]
        %v330 = vld [vmem:[%s293 + $0x24] sm:$0xf]
        %v331 = vld [vmem:[%s293 + $0x28] sm:$0xf]
        %v332 = vld [vmem:[%s293 + $0x2c] sm:$0xf]
        %v333 = vld [vmem:[%s293 + $0x30] sm:$0xf]
        %v334 = vld [vmem:[%s293 + $0x34] sm:$0xf]
        %v335 = vld [vmem:[%s293 + $0x38] sm:$0xf]
        %v336 = vld [vmem:[%s293 + $0x3c] sm:$0xf]
        %v353 = vunpack.c.l.b16 %v321
        %v354 = vunpack.c.l.b16 %v322
        %v355 = vunpack.c.l.b16 %v323
        %v356 = vunpack.c.l.b16 %v324
        %v357 = vunpack.c.l.b16 %v325
        %v358 = vunpack.c.l.b16 %v326
        %v359 = vunpack.c.l.b16 %v327
        %v360 = vunpack.c.l.b16 %v328
        %v361 = vunpack.c.l.b16 %v329
        %v362 = vunpack.c.l.b16 %v330
        %v363 = vunpack.c.l.b16 %v331
        %v364 = vunpack.c.l.b16 %v332
        %v365 = vunpack.c.l.b16 %v333
        %v366 = vunpack.c.l.b16 %v334
        %v367 = vunpack.c.l.b16 %v335
        %v368 = vunpack.c.l.b16 %v336
        %v369 = vpack.c.b16 %v354, %v353
        %v370 = vpack.c.b16 %v356, %v355
        %v371 = vpack.c.b16 %v358, %v357
        %v372 = vpack.c.b16 %v360, %v359
        %v373 = vpack.c.b16 %v362, %v361
        %v374 = vpack.c.b16 %v364, %v363
        %v375 = vpack.c.b16 %v366, %v365
        %v376 = vpack.c.b16 %v368, %v367
        %v385 = vunpack.c.l.b16 %v313
        %v386 = vunpack.c.l.b16 %v314
        %v387 = vunpack.c.l.b16 %v315
        %v388 = vunpack.c.l.b16 %v316
        %v389 = vunpack.c.l.b16 %v317
        %v390 = vunpack.c.l.b16 %v318
        %v391 = vunpack.c.l.b16 %v319
        %v392 = vunpack.c.l.b16 %v320
        %v393 = vpack.c.b16 %v386, %v385
        %v394 = vpack.c.b16 %v388, %v387
        %v395 = vpack.c.b16 %v390, %v389
        %v396 = vpack.c.b16 %v392, %v391
        %vm401 = vcmask 523264
        %v403 = vsel %vm401, %v369, 0
        %v406 = vsel %vm401, %v370, 0
        %v409 = vsel %vm401, %v371, 0
        %v412 = vsel %vm401, %v372, 0
        %v415 = vsel %vm401, %v373, 0
        %v418 = vsel %vm401, %v374, 0
        %v421 = vsel %vm401, %v375, 0
        %v424 = vsel %vm401, %v376, 0
        %426 = vmatpush.bf16.msra.mxu0 0
        %427 = vmatpush.bf16.msra.mxu0 0
        %428 = vmatpush.bf16.msra.mxu0 0
        %429 = vmatpush.bf16.msra.mxu0 0
        %430 = vmatpush.bf16.msra.mxu0 %v396
        %431 = vmatpush.bf16.msra.mxu0 %v395
        %432 = vmatpush.bf16.msra.mxu0 %v394
        %433 = vmatpush.bf16.msra.mxu0 %v393
        %434 = vmatmul.bf16.gmra.mxu0 %v403
        %v435 = vpop.f32.mrf.mxu0
        %v436 = vadd.f32 0.0, %v435
        %v437 = vpop.f32.mrf.mxu0
        %v438 = vadd.f32 0.0, %v437
        %439 = vmatmul.bf16.gmra.mxu0 %v406
        %v440 = vpop.f32.mrf.mxu0
        %v441 = vadd.f32 0.0, %v440
        %v442 = vpop.f32.mrf.mxu0
        %v443 = vadd.f32 0.0, %v442
        %444 = vmatmul.bf16.gmra.mxu0 %v409
        %v445 = vpop.f32.mrf.mxu0
        %v446 = vadd.f32 0.0, %v445
        %v447 = vpop.f32.mrf.mxu0
        %v448 = vadd.f32 0.0, %v447
        %449 = vmatmul.bf16.gmra.mxu0 %v412
        %v450 = vpop.f32.mrf.mxu0
        %v451 = vadd.f32 0.0, %v450
        %v452 = vpop.f32.mrf.mxu0
        %v453 = vadd.f32 0.0, %v452
        %454 = vmatmul.bf16.gmra.mxu0 %v415
        %v455 = vpop.f32.mrf.mxu0
        %v456 = vadd.f32 0.0, %v455
        %v457 = vpop.f32.mrf.mxu0
        %v458 = vadd.f32 0.0, %v457
        %459 = vmatmul.bf16.gmra.mxu0 %v418
        %v460 = vpop.f32.mrf.mxu0
        %v461 = vadd.f32 0.0, %v460
        %v462 = vpop.f32.mrf.mxu0
        %v463 = vadd.f32 0.0, %v462
        %464 = vmatmul.bf16.gmra.mxu0 %v421
        %v465 = vpop.f32.mrf.mxu0
        %v466 = vadd.f32 0.0, %v465
        %v467 = vpop.f32.mrf.mxu0
        %v468 = vadd.f32 0.0, %v467
        %469 = vmatmul.bf16.gmra.mxu0 %v424
        %v470 = vpop.f32.mrf.mxu0
        %v471 = vadd.f32 0.0, %v470
        %v472 = vpop.f32.mrf.mxu0
        %v473 = vadd.f32 0.0, %v472
        %474 = vdwg.mxu0
        %v475 = vunpack.c.l.bf16 %v297
        %v476 = vunpack.c.l.bf16 %v298
        %v477 = vunpack.c.l.bf16 %v299
        %v478 = vunpack.c.l.bf16 %v300
        %v479 = vunpack.c.l.bf16 %v301
        %v480 = vunpack.c.l.bf16 %v302
        %v481 = vunpack.c.l.bf16 %v303
        %v482 = vunpack.c.l.bf16 %v304
        %v483 = vunpack.c.l.bf16 %v305
        %v484 = vunpack.c.l.bf16 %v306
        %v485 = vunpack.c.l.bf16 %v307
        %v486 = vunpack.c.l.bf16 %v308
        %v487 = vunpack.c.l.bf16 %v309
        %v488 = vunpack.c.l.bf16 %v310
        %v489 = vunpack.c.l.bf16 %v311
        %v490 = vunpack.c.l.bf16 %v312
        %v491 = vadd.f32 %v475, %v436
        %v492 = vadd.f32 %v476, %v438
        %v493 = vadd.f32 %v477, %v441
        %v494 = vadd.f32 %v478, %v443
        %v495 = vadd.f32 %v479, %v446
        %v496 = vadd.f32 %v480, %v448
        %v497 = vadd.f32 %v481, %v451
        %v498 = vadd.f32 %v482, %v453
        %v499 = vadd.f32 %v483, %v456
        %v500 = vadd.f32 %v484, %v458
        %v501 = vadd.f32 %v485, %v461
        %v502 = vadd.f32 %v486, %v463
        %v503 = vadd.f32 %v487, %v466
        %v504 = vadd.f32 %v488, %v468
        %v505 = vadd.f32 %v489, %v471
        %v506 = vadd.f32 %v490, %v473
        %v507 = vpack.c.bf16 %v492, %v491
        %v508 = vpack.c.bf16 %v494, %v493
        %v509 = vpack.c.bf16 %v496, %v495
        %v510 = vpack.c.bf16 %v498, %v497
        %v511 = vpack.c.bf16 %v500, %v499
        %v512 = vpack.c.bf16 %v502, %v501
        %v513 = vpack.c.bf16 %v504, %v503
        %v514 = vpack.c.bf16 %v506, %v505
        %v515 = vld [vmem:[%s3] sm:$0xff]
        %v516 = vld [vmem:[%s3 + $0x8] sm:$0xff]
        %v517 = vld [vmem:[%s3 + $0x10] sm:$0xff]
        %v518 = vld [vmem:[%s3 + $0x18] sm:$0xff]
        %v519 = vld [vmem:[%s3 + $0x20] sm:$0xff]
        %v520 = vld [vmem:[%s3 + $0x28] sm:$0xff]
        %s521 = sshra.s32 %s23, 1
        %s522 = sand.u32 %s23, 1
        %s523 = sshra.s32 %s23, 1
        %s524 = sand.u32 %s23, 1
        %s525 = smul.u32 %s521, 2
        %s526 = smul.u32 %s525, 2
        %s527 = sadd.s32 %s526, %s524
        %s528 = scalar_lea.vmem %s4, %s527
        %v529 = vld [vmem:[%s528] ss:$2 sm:$0x3]
        %v531 = vperm.slane %v529, 0
        %v532 = vperm.slane %v529, 1
        %v541 = vunpack.c.l.b16 %v515
        %v542 = vunpack.c.h.b16 %v515
        %v543 = vunpack.c.l.b16 %v516
        %v544 = vunpack.c.h.b16 %v516
        %v545 = vunpack.c.l.b16 %v517
        %v546 = vunpack.c.h.b16 %v517
        %v547 = vunpack.c.l.b16 %v518
        %v548 = vunpack.c.h.b16 %v518
        %v549 = vunpack.c.l.b16 %v519
        %v550 = vunpack.c.h.b16 %v519
        %v551 = vunpack.c.l.b16 %v520
        %v552 = vunpack.c.h.b16 %v520
        %v553 = vpack.c.b16 %v543, %v541
        %v554 = vpack.c.b16 %v544, %v542
        %v555 = vpack.c.b16 %v547, %v545
        %v556 = vpack.c.b16 %v548, %v546
        %v557 = vpack.c.b16 %v551, %v549
        %v558 = vpack.c.b16 %v552, %v550
        %vm565 = vcmask 392192
        %v567 = vsel %vm565, %v507, 0
        %v570 = vsel %vm565, %v508, 0
        %v573 = vsel %vm565, %v509, 0
        %v576 = vsel %vm565, %v510, 0
        %v579 = vsel %vm565, %v511, 0
        %v582 = vsel %vm565, %v512, 0
        %v585 = vsel %vm565, %v513, 0
        %v588 = vsel %vm565, %v514, 0
        %590 = vmatpush.bf16.msra.mxu0 0
        %591 = vmatpush.bf16.msra.mxu0 0
        %592 = vmatpush.bf16.msra.mxu0 0
        %593 = vmatpush.bf16.msra.mxu0 0
        %594 = vmatpush.bf16.msra.mxu0 0
        %595 = vmatpush.bf16.msra.mxu0 %v557
        %596 = vmatpush.bf16.msra.mxu0 %v555
        %597 = vmatpush.bf16.msra.mxu0 %v553
        %598 = vmatmul.bf16.gmra.mxu0 %v567
        %v599 = vpop.f32.mrf.mxu0
        %v600 = vadd.f32 %v531, %v599
        %v601 = vpop.f32.mrf.mxu0
        %v602 = vadd.f32 %v531, %v601
        %603 = vmatmul.bf16.gmra.mxu0 %v570
        %v604 = vpop.f32.mrf.mxu0
        %v605 = vadd.f32 %v531, %v604
        %v606 = vpop.f32.mrf.mxu0
        %v607 = vadd.f32 %v531, %v606
        %608 = vmatmul.bf16.gmra.mxu0 %v573
        %v609 = vpop.f32.mrf.mxu0
        %v610 = vadd.f32 %v531, %v609
        %v611 = vpop.f32.mrf.mxu0
        %v612 = vadd.f32 %v531, %v611
        %613 = vmatmul.bf16.gmra.mxu0 %v576
        %v614 = vpop.f32.mrf.mxu0
        %v615 = vadd.f32 %v531, %v614
        %v616 = vpop.f32.mrf.mxu0
        %v617 = vadd.f32 %v531, %v616
        %618 = vmatmul.bf16.gmra.mxu0 %v579
        %v619 = vpop.f32.mrf.mxu0
        %v620 = vadd.f32 %v531, %v619
        %v621 = vpop.f32.mrf.mxu0
        %v622 = vadd.f32 %v531, %v621
        %623 = vmatmul.bf16.gmra.mxu0 %v582
        %v624 = vpop.f32.mrf.mxu0
        %v625 = vadd.f32 %v531, %v624
        %v626 = vpop.f32.mrf.mxu0
        %v627 = vadd.f32 %v531, %v626
        %628 = vmatmul.bf16.gmra.mxu0 %v585
        %v629 = vpop.f32.mrf.mxu0
        %v630 = vadd.f32 %v531, %v629
        %v631 = vpop.f32.mrf.mxu0
        %v632 = vadd.f32 %v531, %v631
        %633 = vmatmul.bf16.gmra.mxu0 %v588
        %v634 = vpop.f32.mrf.mxu0
        %v635 = vadd.f32 %v531, %v634
        %v636 = vpop.f32.mrf.mxu0
        %v637 = vadd.f32 %v531, %v636
        %638 = vdwg.mxu0
        %639 = vmatpush.bf16.msra.mxu0 0
        %640 = vmatpush.bf16.msra.mxu0 0
        %641 = vmatpush.bf16.msra.mxu0 0
        %642 = vmatpush.bf16.msra.mxu0 0
        %643 = vmatpush.bf16.msra.mxu0 0
        %644 = vmatpush.bf16.msra.mxu0 %v558
        %645 = vmatpush.bf16.msra.mxu0 %v556
        %646 = vmatpush.bf16.msra.mxu0 %v554
        %647 = vmatmul.bf16.gmra.mxu0 %v567
        %v648 = vpop.f32.mrf.mxu0
        %v649 = vadd.f32 %v532, %v648
        %v650 = vpop.f32.mrf.mxu0
        %v651 = vadd.f32 %v532, %v650
        %652 = vmatmul.bf16.gmra.mxu0 %v570
        %v653 = vpop.f32.mrf.mxu0
        %v654 = vadd.f32 %v532, %v653
        %v655 = vpop.f32.mrf.mxu0
        %v656 = vadd.f32 %v532, %v655
        %657 = vmatmul.bf16.gmra.mxu0 %v573
        %v658 = vpop.f32.mrf.mxu0
        %v659 = vadd.f32 %v532, %v658
        %v660 = vpop.f32.mrf.mxu0
        %v661 = vadd.f32 %v532, %v660
        %662 = vmatmul.bf16.gmra.mxu0 %v576
        %v663 = vpop.f32.mrf.mxu0
        %v664 = vadd.f32 %v532, %v663
        %v665 = vpop.f32.mrf.mxu0
        %v666 = vadd.f32 %v532, %v665
        %667 = vmatmul.bf16.gmra.mxu0 %v579
        %v668 = vpop.f32.mrf.mxu0
        %v669 = vadd.f32 %v532, %v668
        %v670 = vpop.f32.mrf.mxu0
        %v671 = vadd.f32 %v532, %v670
        %672 = vmatmul.bf16.gmra.mxu0 %v582
        %v673 = vpop.f32.mrf.mxu0
        %v674 = vadd.f32 %v532, %v673
        %v675 = vpop.f32.mrf.mxu0
        %v676 = vadd.f32 %v532, %v675
        %677 = vmatmul.bf16.gmra.mxu0 %v585
        %v678 = vpop.f32.mrf.mxu0
        %v679 = vadd.f32 %v532, %v678
        %v680 = vpop.f32.mrf.mxu0
        %v681 = vadd.f32 %v532, %v680
        %682 = vmatmul.bf16.gmra.mxu0 %v588
        %v683 = vpop.f32.mrf.mxu0
        %v684 = vadd.f32 %v532, %v683
        %v685 = vpop.f32.mrf.mxu0
        %v686 = vadd.f32 %v532, %v685
        %687 = vdwg.mxu0
        %v688 = vpack.c.bf16 %v649, %v600
        %v689 = vpack.c.bf16 %v651, %v602
        %v690 = vpack.c.bf16 %v654, %v605
        %v691 = vpack.c.bf16 %v656, %v607
        %v692 = vpack.c.bf16 %v659, %v610
        %v693 = vpack.c.bf16 %v661, %v612
        %v694 = vpack.c.bf16 %v664, %v615
        %v695 = vpack.c.bf16 %v666, %v617
        %v696 = vpack.c.bf16 %v669, %v620
        %v697 = vpack.c.bf16 %v671, %v622
        %v698 = vpack.c.bf16 %v674, %v625
        %v699 = vpack.c.bf16 %v676, %v627
        %v700 = vpack.c.bf16 %v679, %v630
        %v701 = vpack.c.bf16 %v681, %v632
        %v702 = vpack.c.bf16 %v684, %v635
        %v703 = vpack.c.bf16 %v686, %v637
        %704 = vst [vmem:[%s273] sm:$0xff] %v688
        %705 = vst [vmem:[%s273 + $0x8] sm:$0xff] %v689
        %706 = vst [vmem:[%s273 + $0x10] sm:$0xff] %v690
        %707 = vst [vmem:[%s273 + $0x18] sm:$0xff] %v691
        %708 = vst [vmem:[%s273 + $0x20] sm:$0xff] %v692
        %709 = vst [vmem:[%s273 + $0x28] sm:$0xff] %v693
        %710 = vst [vmem:[%s273 + $0x30] sm:$0xff] %v694
        %711 = vst [vmem:[%s273 + $0x38] sm:$0xff] %v695
        %712 = vst [vmem:[%s273 + $0x40] sm:$0xff] %v696
        %713 = vst [vmem:[%s273 + $0x48] sm:$0xff] %v697
        %714 = vst [vmem:[%s273 + $0x50] sm:$0xff] %v698
        %715 = vst [vmem:[%s273 + $0x58] sm:$0xff] %v699
        %716 = vst [vmem:[%s273 + $0x60] sm:$0xff] %v700
        %717 = vst [vmem:[%s273 + $0x68] sm:$0xff] %v701
        %718 = vst [vmem:[%s273 + $0x70] sm:$0xff] %v702
        %719 = vst [vmem:[%s273 + $0x78] sm:$0xff] %v703
        %s720 = sand.u32 %s163, 1
        %s721 = scalar_lea.sflag [#allocation3], %s720
        %s722 = sand.u32 %s163, 1
        %s723 = smul.addr %s722, 128
        %s724 = scalar_lea.vmem [#allocation2], %s723
        // Predicated region
        $region41: #{tpu_custom_call.1} parent=39 // pred_check
          %p725 = pneg %p173
        $region42: #{tpu_custom_call.1} parent=39 // pred_check_branch
          %727 = sbr.rel (%p725) target = $region44
        $region43: #{tpu_custom_call.1} parent=39 // pred_region
          %s728 = smul.u32 16, %s24
          %730 = vsyncadd %s721, 0
          %s731 = smul.addr %s728, 2
          %s732 = smul.addr %s23, 64
          %s733 = sadd.s32 %s731, %s732
          %s734 = smul.addr %s733, 4
          %s735 = scalar_lea.hbm %s5, %s734
          %s736 = sshll.u32 %s724, 4
          %s737 = int_to_ptr.vmem [resolvable:$true] %s736
          %s738 = sshll.u32 %s735, 4
          %s739 = int_to_ptr.hbm [resolvable:$true] %s738
          %744 = dma.vmem_to_hbm [thread:$0]  %s737, 2048, %s739, %s721, 128, 128, 8
        $region44: #{tpu_custom_call.1} parent=39 // pred_fallthru
          _
      $region40: #{tpu_custom_call.1} parent=5 // pred_fallthru
        _
      %p745 = scmp.le.s32.totalorder 2, %s14
      // Predicated region
      $region45: #{tpu_custom_call.1} parent=5 // pred_check
        %p746 = pneg %p745
      $region46: #{tpu_custom_call.1} parent=5 // pred_check_branch
        %748 = sbr.rel (%p746) target = $region48
      $region47: #{tpu_custom_call.1} parent=5 // pred_region
        %s749 = ssub.s32 %s14, 2
        // Predicated region
        $region49: #{tpu_custom_call.1} parent=47 // pred_check
          %p750 = pneg %p179
        $region50: #{tpu_custom_call.1} parent=47 // pred_check_branch
          %752 = sbr.rel (%p750) target = $region52
        $region51: #{tpu_custom_call.1} parent=47 // pred_region
          %s753 = sand.u32 %s164, 1
          %s754 = scalar_lea.sflag [#allocation3], %s753
          %s755 = sand.u32 %s164, 1
          %s756 = smul.addr %s755, 128
          %s757 = scalar_lea.vmem [#allocation2], %s756
          %759 = dma.done %s754, 2048
        $region52: #{tpu_custom_call.1} parent=47 // pred_fallthru
          _
      $region48: #{tpu_custom_call.1} parent=5 // pred_fallthru
        _
    $region6: #{tpu_custom_call.1} parent=1 // loop_footer
      %s18 = sadd.s32 1, %s14
    $region7: #{tpu_custom_call.1} parent=1 // loop_footer_branch
      %13 = sbr.rel target = $region3
    $region8: #{tpu_custom_call.1} parent=1 // loop_exit
      _
    %760 = vsyncpa [#allocation3], 1
    %s761 = scalar_lea.sflag [#allocation3], 1
    %762 = vsyncpa %s761, 1

</llo_original>
